<compile_context>
chip_gen: v7x
topology: tpu7x:2x2x1
jax: 0.10.0
libtpu: 0.0.40
codegen_flags: <defaults>
</compile_context>

<pallas_src>
import functools

import jax
import jax.numpy as jnp
from jax.experimental import pallas as pl
from jax.experimental.pallas import tpu as pltpu

LANE = 128


def _round_up(x, m):
    return ((x + m - 1) // m) * m


# ---------------------------------------------------------------------------
# Kernel
# ---------------------------------------------------------------------------
def _actor_kernel(obs_ref,
                  w0_ref, b0_ref,
                  w1_ref, b1_ref,
                  w2_ref, b2_ref,
                  out_ref,
                  *, log_std_min, log_std_max, logstd_offset):
    x = obs_ref[...]

    # hidden layer 0: Linear + ReLU
    h = jnp.dot(x, w0_ref[...], preferred_element_type=jnp.float32) + b0_ref[...]
    h = jnp.maximum(h, 0.0)

    # hidden layer 1: Linear + ReLU
    h = jnp.dot(h, w1_ref[...], preferred_element_type=jnp.float32) + b1_ref[...]
    h = jnp.maximum(h, 0.0)

    # head: single packed slab.  mu columns in lanes [0, logstd_offset),
    # log_std columns in lanes [logstd_offset, ...).
    out = jnp.dot(h, w2_ref[...], preferred_element_type=jnp.float32) + b2_ref[...]

    # log_std squashing (tanh -> affine into [lo, hi] -> exp), applied to the
    # log_std lanes only via a lane-index select.  tanh/exp are EUP work and
    # the slab is a single 128-lane vreg group, so computing on all lanes and
    # selecting is the cheapest formulation (no sub-vreg extraction).
    lane = jax.lax.broadcasted_iota(jnp.int32, out.shape, dimension=1)
    t = jnp.tanh(out)
    log_std = log_std_min + 0.5 * (log_std_max - log_std_min) * (t + 1.0)
    std = jnp.exp(log_std)

    out_ref[...] = jnp.where(lane >= logstd_offset, std, out).astype(out_ref.dtype)


# ---------------------------------------------------------------------------
# Parameter packing (done ONCE, outside the forward hot path)
# ---------------------------------------------------------------------------
def pack_actor_params(params):
    """Packs the head so mu / log_std land at fixed lane offsets in one slab.

    For action_dim <= 64 the packed head is (hidden_dim, 128): mu at lanes
    [0, ad), log_std at lanes [64, 64+ad).  For larger action_dim the offset
    is 128-aligned and the slab widens accordingly.
    """
    (w0, b0), (w1, b1), (w2, b2) = params
    hidden_dim, two_ad = w2.shape
    action_dim = two_ad // 2

    logstd_offset = 64 if action_dim <= 64 else _round_up(action_dim, LANE)
    head_width = _round_up(logstd_offset + action_dim, LANE)

    w2p = jnp.zeros((hidden_dim, head_width), w2.dtype)
    w2p = w2p.at[:, :action_dim].set(w2[:, :action_dim])
    w2p = w2p.at[:, logstd_offset:logstd_offset + action_dim].set(w2[:, action_dim:])
    b2p = jnp.zeros((1, head_width), b2.dtype)
    b2p = b2p.at[:, :action_dim].set(b2[:, :action_dim])
    b2p = b2p.at[:, logstd_offset:logstd_offset + action_dim].set(b2[:, action_dim:])

    return {
        "w0": w0, "b0": b0,
        "w1": w1, "b1": b1,
        "w2p": w2p, "b2p": b2p,
        "action_dim": int(action_dim),
        "logstd_offset": int(logstd_offset),
        "head_width": int(head_width),
    }


# ---------------------------------------------------------------------------
# Wrapper
# ---------------------------------------------------------------------------
def actor_forward(obs, packed, log_std_bounds, *, num_batch_tiles=1):
    """Runs the Actor trunk in one batch-tiled Pallas call. Returns (mu, std).

    num_batch_tiles: 1 for v5e/v6e (single TensorCore -> minimize grid-step
    overhead); an even number >= 2 on v7x so the "parallel" batch axis shards
    across both TensorCores.
    """
    w0, b0 = packed["w0"], packed["b0"]
    w1, b1 = packed["w1"], packed["b1"]
    w2p, b2p = packed["w2p"], packed["b2p"]
    action_dim = packed["action_dim"]
    logstd_offset = packed["logstd_offset"]
    head_width = packed["head_width"]

    batch, obs_dim = obs.shape
    hidden_dim = w0.shape[1]
    log_std_min, log_std_max = log_std_bounds

    # --- batch tiling: tile covers ceil(batch/tiles) rows rounded to 8, so
    # padding is at most 7 rows per tile (no near-2x blow-ups, tiny pad copy).
    num_batch_tiles = max(1, int(num_batch_tiles))
    tb = _round_up(max(1, -(-batch // num_batch_tiles)), 8)
    padded_batch = tb * num_batch_tiles
    if padded_batch != batch:
        obs = jnp.pad(obs, ((0, padded_batch - batch), (0, 0)))
    grid = (num_batch_tiles,)

    kernel = functools.partial(
        _actor_kernel,
        log_std_min=float(log_std_min),
        log_std_max=float(log_std_max),
        logstd_offset=int(logstd_offset),
    )

    # Weights/biases: same block every grid step -> resident in VMEM.
    # (At large hidden_dim: bf16 weights and/or pipeline_mode=pl.Buffered(1)
    # reclaim the duplicate resident buffers on v7x's 64 MiB VMEM.)
    resident = lambda shape: pl.BlockSpec(shape, lambda i: (0, 0))

    flops = 2 * padded_batch * (obs_dim * hidden_dim
                                + hidden_dim * hidden_dim
                                + hidden_dim * head_width)
    transcendentals = 2 * padded_batch * head_width            # tanh + exp
    bytes_accessed = 4 * (padded_batch * obs_dim
                          + obs_dim * hidden_dim + hidden_dim
                          + hidden_dim * hidden_dim + hidden_dim
                          + hidden_dim * head_width + head_width
                          + padded_batch * head_width)

    out_slab = pl.pallas_call(
        kernel,
        grid=grid,
        in_specs=[
            pl.BlockSpec((tb, obs_dim), lambda i: (i, 0)),        # obs tile
            resident((obs_dim, hidden_dim)),                      # w0
            resident((1, hidden_dim)),                            # b0
            resident((hidden_dim, hidden_dim)),                   # w1
            resident((1, hidden_dim)),                            # b1
            resident((hidden_dim, head_width)),                   # w2 (packed)
            resident((1, head_width)),                            # b2 (packed)
        ],
        out_specs=pl.BlockSpec((tb, head_width), lambda i: (i, 0)),
        out_shape=jax.ShapeDtypeStruct((padded_batch, head_width), jnp.float32),
        compiler_params=pltpu.CompilerParams(
            dimension_semantics=("parallel",),
        ),
        cost_estimate=pl.CostEstimate(
            flops=int(flops),
            transcendentals=int(transcendentals),
            bytes_accessed=int(bytes_accessed),
        ),
    )(obs, w0, b0, w1, b1, w2p, b2p)

    # Narrow slices + batch un-pad happen in the wrapper (layout plumbing).
    mu = out_slab[:batch, :action_dim]
    std = out_slab[:batch, logstd_offset:logstd_offset + action_dim]
    return mu, std


# ---------------------------------------------------------------------------
# Deterministic parameter init (xavier_uniform for weights, zeros for biases)
# ---------------------------------------------------------------------------
def _xavier_uniform(key, fan_in, fan_out):
    limit = jnp.sqrt(6.0 / (fan_in + fan_out))
    # stored as (in, out): matmul-ready transpose of PyTorch's (out, in)
    return jax.random.uniform(key, (fan_in, fan_out), jnp.float32, -limit, limit)


def make_actor_params(key, obs_dim, action_dim, hidden_dim, hidden_depth):
    assert hidden_depth == 2, "this script builds the depth-2 trunk explicitly"
    k0, k1, k2 = jax.random.split(key, 3)
    w0 = _xavier_uniform(k0, obs_dim, hidden_dim)
    b0 = jnp.zeros((1, hidden_dim), jnp.float32)
    w1 = _xavier_uniform(k1, hidden_dim, hidden_dim)
    b1 = jnp.zeros((1, hidden_dim), jnp.float32)
    w2 = _xavier_uniform(k2, hidden_dim, 2 * action_dim)
    b2 = jnp.zeros((1, 2 * action_dim), jnp.float32)
    return ((w0, b0), (w1, b1), (w2, b2))


# ---------------------------------------------------------------------------
# Pure-JAX reference (mirrors the PyTorch forward exactly)
# ---------------------------------------------------------------------------
def actor_forward_ref(obs, params, log_std_bounds):
    (w0, b0), (w1, b1), (w2, b2) = params
    h = jnp.maximum(obs @ w0 + b0, 0.0)
    h = jnp.maximum(h @ w1 + b1, 0.0)
    out = h @ w2 + b2
    action_dim = out.shape[-1] // 2
    mu, log_std = out[:, :action_dim], out[:, action_dim:]
    log_std = jnp.tanh(log_std)
    lo, hi = log_std_bounds
    log_std = lo + 0.5 * (hi - lo) * (log_std + 1.0)
    return mu, jnp.exp(log_std)


if __name__ == "__main__":
    # Small shapes consistent with the module: obs_dim=32, hidden_dim=32,
    # hidden_depth=2, action_dim=4.
    batch, obs_dim, action_dim, hidden_dim, hidden_depth = 32, 32, 4, 32, 2
    log_std_bounds = (-5.0, 2.0)

    key = jax.random.PRNGKey(0)
    k_obs, k_params = jax.random.split(key)
    obs = jax.random.normal(k_obs, (batch, obs_dim), jnp.float32)
    params = make_actor_params(k_params, obs_dim, action_dim, hidden_dim, hidden_depth)

    # Pack the head ONCE (outside the forward hot path).
    packed = pack_actor_params(params)

    mu_ref, std_ref = actor_forward_ref(obs, params, log_std_bounds)

    # Single-tile path (v5e/v6e default: one grid step, weights resident).
    mu, std = actor_forward(obs, packed, log_std_bounds, num_batch_tiles=1)
    jax.block_until_ready((mu, std))
    assert mu.shape == (batch, action_dim) and std.shape == (batch, action_dim)
    assert jnp.allclose(mu, mu_ref, atol=1e-5, rtol=1e-5)
    assert jnp.allclose(std, std_ref, atol=1e-5, rtol=1e-5)

    # Multi-tile path (v7x-style 2-TC sharding; exercises the pipelined grid).
    mu4, std4 = actor_forward(obs, packed, log_std_bounds, num_batch_tiles=4)
    jax.block_until_ready((mu4, std4))
    assert jnp.allclose(mu4, mu_ref, atol=1e-5, rtol=1e-5)
    assert jnp.allclose(std4, std_ref, atol=1e-5, rtol=1e-5)

    # TODO(synk): the SquashedNormal/TanhTransform distribution object
    # (rsample / log_prob / mean=tanh(mu)) is Python-side glue over (mu, std),
    # not kernel work; this kernel returns the (mu, std) that parameterize it.
    print("KERNEL_OK")
</pallas_src>

<mosaic_0001>
module attributes {stable_mosaic.version = 11 : i64} {
  func.func @_actor_kernel(%arg0: i32, %arg1: memref<32x32xf32, #tpu.memory_space<vmem>>, %arg2: memref<32x32xf32, #tpu.memory_space<vmem>>, %arg3: memref<1x32xf32, #tpu.memory_space<vmem>>, %arg4: memref<32x32xf32, #tpu.memory_space<vmem>>, %arg5: memref<1x32xf32, #tpu.memory_space<vmem>>, %arg6: memref<32x128xf32, #tpu.memory_space<vmem>>, %arg7: memref<1x128xf32, #tpu.memory_space<vmem>>, %arg8: memref<32x128xf32, #tpu.memory_space<vmem>>) attributes {dimension_semantics = [#tpu.dimension_semantics<parallel>], iteration_bounds = array<i64: 1>, scalar_prefetch = 0 : i64, scratch_operands = 0 : i64, tpu.core_type = #tpu.core_type<tc>, window_params = [{transform_indices = @transform_0, window_bounds = array<i64: 32, 32>}, {pipeline_mode = #tpu.pipeline_mode<synchronous>, transform_indices = @transform_1, window_bounds = array<i64: 32, 32>}, {pipeline_mode = #tpu.pipeline_mode<synchronous>, transform_indices = @transform_2, window_bounds = array<i64: 1, 32>}, {pipeline_mode = #tpu.pipeline_mode<synchronous>, transform_indices = @transform_3, window_bounds = array<i64: 32, 32>}, {pipeline_mode = #tpu.pipeline_mode<synchronous>, transform_indices = @transform_4, window_bounds = array<i64: 1, 32>}, {pipeline_mode = #tpu.pipeline_mode<synchronous>, transform_indices = @transform_5, window_bounds = array<i64: 32, 128>}, {pipeline_mode = #tpu.pipeline_mode<synchronous>, transform_indices = @transform_6, window_bounds = array<i64: 1, 128>}, {transform_indices = @transform_7, window_bounds = array<i64: 32, 128>}]} {
    %c0 = arith.constant 0 : index
    %c0_0 = arith.constant 0 : index
    %0 = vector.load %arg1[%c0, %c0_0] : memref<32x32xf32, #tpu.memory_space<vmem>>, vector<32x32xf32>
    %c0_1 = arith.constant 0 : index
    %c0_2 = arith.constant 0 : index
    %1 = vector.load %arg2[%c0_1, %c0_2] : memref<32x32xf32, #tpu.memory_space<vmem>>, vector<32x32xf32>
    %cst = arith.constant dense<0.000000e+00> : vector<32x32xf32>
    %2 = tpu.matmul %0, %1, %cst {dimension_numbers = #tpu.dot_dimension_numbers<[1], [0], [0], [1], [0, 0, 1, 1], [], []>} : vector<32x32xf32>, vector<32x32xf32>, vector<32x32xf32> -> vector<32x32xf32>
    %c0_3 = arith.constant 0 : index
    %c0_4 = arith.constant 0 : index
    %3 = vector.load %arg3[%c0_3, %c0_4] : memref<1x32xf32, #tpu.memory_space<vmem>>, vector<1x32xf32>
    %4 = vector.broadcast %3 : vector<1x32xf32> to vector<32x32xf32>
    %5 = arith.addf %2, %4 : vector<32x32xf32>
    %cst_5 = arith.constant 0.000000e+00 : f32
    %6 = vector.broadcast %cst_5 : f32 to vector<32x32xf32>
    %7 = arith.maximumf %5, %6 : vector<32x32xf32>
    %c0_6 = arith.constant 0 : index
    %c0_7 = arith.constant 0 : index
    %8 = vector.load %arg4[%c0_6, %c0_7] : memref<32x32xf32, #tpu.memory_space<vmem>>, vector<32x32xf32>
    %cst_8 = arith.constant dense<0.000000e+00> : vector<32x32xf32>
    %9 = tpu.matmul %7, %8, %cst_8 {dimension_numbers = #tpu.dot_dimension_numbers<[1], [0], [0], [1], [0, 0, 1, 1], [], []>} : vector<32x32xf32>, vector<32x32xf32>, vector<32x32xf32> -> vector<32x32xf32>
    %c0_9 = arith.constant 0 : index
    %c0_10 = arith.constant 0 : index
    %10 = vector.load %arg5[%c0_9, %c0_10] : memref<1x32xf32, #tpu.memory_space<vmem>>, vector<1x32xf32>
    %11 = vector.broadcast %10 : vector<1x32xf32> to vector<32x32xf32>
    %12 = arith.addf %9, %11 : vector<32x32xf32>
    %cst_11 = arith.constant 0.000000e+00 : f32
    %13 = vector.broadcast %cst_11 : f32 to vector<32x32xf32>
    %14 = arith.maximumf %12, %13 : vector<32x32xf32>
    %c0_12 = arith.constant 0 : index
    %c0_13 = arith.constant 0 : index
    %15 = vector.load %arg6[%c0_12, %c0_13] : memref<32x128xf32, #tpu.memory_space<vmem>>, vector<32x128xf32>
    %cst_14 = arith.constant dense<0.000000e+00> : vector<32x128xf32>
    %16 = tpu.matmul %14, %15, %cst_14 {dimension_numbers = #tpu.dot_dimension_numbers<[1], [0], [0], [1], [0, 0, 1, 1], [], []>} : vector<32x32xf32>, vector<32x128xf32>, vector<32x128xf32> -> vector<32x128xf32>
    %c0_15 = arith.constant 0 : index
    %c0_16 = arith.constant 0 : index
    %17 = vector.load %arg7[%c0_15, %c0_16] : memref<1x128xf32, #tpu.memory_space<vmem>>, vector<1x128xf32>
    %18 = vector.broadcast %17 : vector<1x128xf32> to vector<32x128xf32>
    %19 = arith.addf %16, %18 : vector<32x128xf32>
    %20 = tpu.iota {dimensions = array<i32: 1>} : vector<32x128xi32>
    %21 = math.tanh %19 : vector<32x128xf32>
    %cst_17 = arith.constant 1.000000e+00 : f32
    %22 = vector.broadcast %cst_17 : f32 to vector<32x128xf32>
    %23 = arith.addf %21, %22 : vector<32x128xf32>
    %cst_18 = arith.constant 3.500000e+00 : f32
    %24 = vector.broadcast %cst_18 : f32 to vector<32x128xf32>
    %25 = arith.mulf %24, %23 : vector<32x128xf32>
    %cst_19 = arith.constant -5.000000e+00 : f32
    %26 = vector.broadcast %cst_19 : f32 to vector<32x128xf32>
    %27 = arith.addf %26, %25 : vector<32x128xf32>
    %28 = math.exp %27 : vector<32x128xf32>
    %c64_i32 = arith.constant 64 : i32
    %29 = vector.broadcast %c64_i32 : i32 to vector<32x128xi32>
    %30 = arith.cmpi sge, %20, %29 : vector<32x128xi32>
    %31 = arith.select %30, %28, %19 : vector<32x128xi1>, vector<32x128xf32>
    %c0_20 = arith.constant 0 : index
    %c0_21 = arith.constant 0 : index
    %32 = vector.load %arg8[%c0_20, %c0_21] : memref<32x128xf32, #tpu.memory_space<vmem>>, vector<32x128xf32>
    tpu.vector_store %arg8[%c0_20, %c0_21], %31 {strides = array<i32>} : memref<32x128xf32, #tpu.memory_space<vmem>>, vector<32x128xf32>,
    return
  }
  func.func @transform_0(%arg0: i32) -> (i32, i32) {
    %c0_i32 = arith.constant 0 : i32
    %c0_i32_0 = arith.constant 0 : i32
    return %arg0, %c0_i32 : i32, i32
  }
  func.func @transform_1(%arg0: i32) -> (i32, i32) {
    %c0_i32 = arith.constant 0 : i32
    %c0_i32_0 = arith.constant 0 : i32
    %c0_i32_1 = arith.constant 0 : i32
    return %c0_i32, %c0_i32_0 : i32, i32
  }
  func.func @transform_2(%arg0: i32) -> (i32, i32) {
    %c0_i32 = arith.constant 0 : i32
    %c0_i32_0 = arith.constant 0 : i32
    %c0_i32_1 = arith.constant 0 : i32
    return %c0_i32, %c0_i32_0 : i32, i32
  }
  func.func @transform_3(%arg0: i32) -> (i32, i32) {
    %c0_i32 = arith.constant 0 : i32
    %c0_i32_0 = arith.constant 0 : i32
    %c0_i32_1 = arith.constant 0 : i32
    return %c0_i32, %c0_i32_0 : i32, i32
  }
  func.func @transform_4(%arg0: i32) -> (i32, i32) {
    %c0_i32 = arith.constant 0 : i32
    %c0_i32_0 = arith.constant 0 : i32
    %c0_i32_1 = arith.constant 0 : i32
    return %c0_i32, %c0_i32_0 : i32, i32
  }
  func.func @transform_5(%arg0: i32) -> (i32, i32) {
    %c0_i32 = arith.constant 0 : i32
    %c0_i32_0 = arith.constant 0 : i32
    %c0_i32_1 = arith.constant 0 : i32
    return %c0_i32, %c0_i32_0 : i32, i32
  }
  func.func @transform_6(%arg0: i32) -> (i32, i32) {
    %c0_i32 = arith.constant 0 : i32
    %c0_i32_0 = arith.constant 0 : i32
    %c0_i32_1 = arith.constant 0 : i32
    return %c0_i32, %c0_i32_0 : i32, i32
  }
  func.func @transform_7(%arg0: i32) -> (i32, i32) {
    %c0_i32 = arith.constant 0 : i32
    %c0_i32_0 = arith.constant 0 : i32
    return %arg0, %c0_i32 : i32, i32
  }
}

</mosaic_0001>

<llo_original>
// kernel: tpu_custom_call.1
$region0: #{tpu_custom_call.1}
  #allocation0 [shape = 'u32[]', space=smem, size = 0x4, offset = 0x4, fixed_abs, tag = 'smem constant byte address 0x4 - core index']
  #allocation1 [shape = 'u32[144,128]{1,0:T(1,128)}', space=vmem, size = 0x12000, scoped, tag = 'internal scratch']
  %s0 = inlined_call_operand.hbm [shape: f32[32,32], index: 0, kind: input, shape index: {}]
  %s1 = inlined_call_operand.hbm [shape: f32[32,32], index: 1, kind: input, shape index: {}]
  %s2 = inlined_call_operand.vmem [shape: f32[1,32], index: 2, kind: input, shape index: {}]
  %s3 = inlined_call_operand.hbm [shape: f32[32,32], index: 3, kind: input, shape index: {}]
  %s4 = inlined_call_operand.vmem [shape: f32[1,32], index: 4, kind: input, shape index: {}]
  %s5 = inlined_call_operand.hbm [shape: f32[32,128], index: 5, kind: input, shape index: {}]
  %s6 = inlined_call_operand.vmem [shape: f32[1,128], index: 6, kind: input, shape index: {}]
  %s7 = inlined_call_operand.hbm [shape: f32[32,128], index: 7, kind: output, shape index: {}]
  %s8 = sld [smem:[#allocation0]]
  $region54: #{tpu_custom_call.1} parent=0
    _
  %s10 = ssub.s32 1, %s8
  %s11 = scalar_select 0, %s10, %s8
  $region1: #{tpu_custom_call.1} parent=0
    #allocation2 [shape = 'u8[16384]{0}', space=vmem, size = 0x4000, scoped, tag = 'input window, operand 0, single buffered']
    #allocation3 [shape = 's32[1]{0}', space=sflag, size = 0x4, scoped, tag = 'scoped memory for tpu_custom_call.1']
    #allocation4 [shape = 's32[1]{0}', space=sflag, size = 0x4, scoped, tag = 'scoped memory for tpu_custom_call.1']
    #allocation5 [shape = 'u8[16384]{0}', space=vmem, size = 0x4000, scoped, tag = 'input window, operand 1, single buffered']
    #allocation6 [shape = 's32[1]{0}', space=sflag, size = 0x4, scoped, tag = 'scoped memory for tpu_custom_call.1']
    #allocation7 [shape = 'u8[16384]{0}', space=vmem, size = 0x4000, scoped, tag = 'input window, operand 3, single buffered']
    #allocation8 [shape = 'u8[16384]{0}', space=vmem, size = 0x4000, scoped, tag = 'input window, operand 5, single buffered']
    #allocation9 [shape = 's32[1]{0}', space=sflag, size = 0x4, scoped, tag = 'scoped memory for tpu_custom_call.1']
    #allocation10 [shape = 'u8[16384]{0}', space=vmem, size = 0x4000, scoped, tag = 'output window, operand 0, single buffered']
    %12 = vsyncpa [#allocation3], 0
    %13 = vsyncpa [#allocation6], 0
    %14 = vsyncpa [#allocation9], 0
    %15 = vsyncpa [#allocation4], 0
    // Predicated region
    $region2: #{tpu_custom_call.1} parent=1 // pred_check
      _
    $region3: #{tpu_custom_call.1} parent=1 // pred_check_branch
      %17 = sbr.rel (0) target = $region5
    $region4: #{tpu_custom_call.1} parent=1 // pred_region
      %s19 = ssub.s32 512, 512
      %20 = vsyncadd [#allocation3], %s19
      %s21 = sshll.u32 [#allocation2], 4
      %s22 = int_to_ptr.vmem [resolvable:$true] %s21
      %27 = dma.hbm_to_vmem [thread:$0]  %s0, 512, %s22, [#allocation3], 128, 128, 8
    $region5: #{tpu_custom_call.1} parent=1 // pred_fallthru
      _
    // Predicated region
    $region6: #{tpu_custom_call.1} parent=1 // pred_check
      _
    $region7: #{tpu_custom_call.1} parent=1 // pred_check_branch
      %29 = sbr.rel (0) target = $region9
    $region8: #{tpu_custom_call.1} parent=1 // pred_region
      %s31 = ssub.s32 512, 512
      %32 = vsyncadd [#allocation6], %s31
      %s33 = sshll.u32 [#allocation5], 4
      %s34 = int_to_ptr.vmem [resolvable:$true] %s33
      %39 = dma.hbm_to_vmem [thread:$0]  %s1, 512, %s34, [#allocation6], 128, 128, 8
    $region9: #{tpu_custom_call.1} parent=1 // pred_fallthru
      _
    // Predicated region
    $region10: #{tpu_custom_call.1} parent=1 // pred_check
      _
    $region11: #{tpu_custom_call.1} parent=1 // pred_check_branch
      %41 = sbr.rel (0) target = $region13
    $region12: #{tpu_custom_call.1} parent=1 // pred_region
      _
    $region13: #{tpu_custom_call.1} parent=1 // pred_fallthru
      _
    // Predicated region
    $region14: #{tpu_custom_call.1} parent=1 // pred_check
      _
    $region15: #{tpu_custom_call.1} parent=1 // pred_check_branch
      %43 = sbr.rel (0) target = $region17
    $region16: #{tpu_custom_call.1} parent=1 // pred_region
      %s45 = ssub.s32 512, 512
      %46 = vsyncadd [#allocation6], %s45
      %s47 = sshll.u32 [#allocation7], 4
      %s48 = int_to_ptr.vmem [resolvable:$true] %s47
      %53 = dma.hbm_to_vmem [thread:$0]  %s3, 512, %s48, [#allocation6], 128, 128, 8
    $region17: #{tpu_custom_call.1} parent=1 // pred_fallthru
      _
    // Predicated region
    $region18: #{tpu_custom_call.1} parent=1 // pred_check
      _
    $region19: #{tpu_custom_call.1} parent=1 // pred_check_branch
      %55 = sbr.rel (0) target = $region21
    $region20: #{tpu_custom_call.1} parent=1 // pred_region
      _
    $region21: #{tpu_custom_call.1} parent=1 // pred_fallthru
      _
    // Predicated region
    $region22: #{tpu_custom_call.1} parent=1 // pred_check
      _
    $region23: #{tpu_custom_call.1} parent=1 // pred_check_branch
      %57 = sbr.rel (0) target = $region25
    $region24: #{tpu_custom_call.1} parent=1 // pred_region
      %s59 = ssub.s32 512, 512
      %60 = vsyncadd [#allocation9], %s59
      %s61 = sshll.u32 [#allocation8], 4
      %s62 = int_to_ptr.vmem [resolvable:$true] %s61
      %67 = dma.hbm_to_vmem [thread:$0]  %s5, 512, %s62, [#allocation9], 128, 128, 8
    $region25: #{tpu_custom_call.1} parent=1 // pred_fallthru
      _
    // Predicated region
    $region26: #{tpu_custom_call.1} parent=1 // pred_check
      _
    $region27: #{tpu_custom_call.1} parent=1 // pred_check_branch
      %69 = sbr.rel (0) target = $region29
    $region28: #{tpu_custom_call.1} parent=1 // pred_region
      _
    $region29: #{tpu_custom_call.1} parent=1 // pred_fallthru
      _
    // Predicated region
    $region30: #{tpu_custom_call.1} parent=1 // pred_check
      _
    $region31: #{tpu_custom_call.1} parent=1 // pred_check_branch
      %71 = sbr.rel (0) target = $region33
    $region32: #{tpu_custom_call.1} parent=1 // pred_region
      %72 = dma.done [#allocation3], 512
    $region33: #{tpu_custom_call.1} parent=1 // pred_fallthru
      _
    // Predicated region
    $region34: #{tpu_custom_call.1} parent=1 // pred_check
      _
    $region35: #{tpu_custom_call.1} parent=1 // pred_check_branch
      %74 = sbr.rel (0) target = $region37
    $region36: #{tpu_custom_call.1} parent=1 // pred_region
      %75 = dma.done [#allocation6], 512
    $region37: #{tpu_custom_call.1} parent=1 // pred_fallthru
      _
    // Predicated region
    $region38: #{tpu_custom_call.1} parent=1 // pred_check
      _
    $region39: #{tpu_custom_call.1} parent=1 // pred_check_branch
      %77 = sbr.rel (0) target = $region41
    $region40: #{tpu_custom_call.1} parent=1 // pred_region
      %78 = dma.done [#allocation6], 512
    $region41: #{tpu_custom_call.1} parent=1 // pred_fallthru
      _
    // Predicated region
    $region42: #{tpu_custom_call.1} parent=1 // pred_check
      _
    $region43: #{tpu_custom_call.1} parent=1 // pred_check_branch
      %80 = sbr.rel (0) target = $region45
    $region44: #{tpu_custom_call.1} parent=1 // pred_region
      %81 = dma.done [#allocation9], 512
    $region45: #{tpu_custom_call.1} parent=1 // pred_fallthru
      _
    %v82 = vld [vmem:[#allocation2] sm:$0xff]
    %v83 = vld [vmem:[#allocation2 + $0x8] sm:$0xff]
    %v84 = vld [vmem:[#allocation2 + $0x10] sm:$0xff]
    %v85 = vld [vmem:[#allocation2 + $0x18] sm:$0xff]
    %v86 = vld [vmem:[#allocation5] sm:$0xff]
    %v87 = vld [vmem:[#allocation5 + $0x8] sm:$0xff]
    %v88 = vld [vmem:[#allocation5 + $0x10] sm:$0xff]
    %v89 = vld [vmem:[#allocation5 + $0x18] sm:$0xff]
    %v90 = vld [vmem:[%s2] sm:$0x1]
    %v92 = vlaneseq
    %v93 = vshrl.u32 %v92, 7
    %v94 = vsub.s32 0, %v93
    %v95 = vrot.slane %v90, %v94
    %vm97 = vcmask 261120
    %v99 = vsel %vm97, %v82, 0
    %v102 = vsel %vm97, %v83, 0
    %v105 = vsel %vm97, %v84, 0
    %v108 = vsel %vm97, %v85, 0
    %110 = vmatprep.subr.mxu0 0.0
    %111 = vmatpush1.msra.mxu0 %v86
    %112 = vmatprep.subr.mxu0 0.0
    %113 = vmatpush1.msra.mxu0 %v87
    %114 = vmatprep.subr.mxu0 0.0
    %115 = vmatpush1.msra.mxu0 %v88
    %116 = vmatprep.subr.mxu0 0.0
    %117 = vmatpush1.msra.mxu0 %v89
    %118 = vmatprep.subr.mxu0 0.0
    %119 = vmatpush1.msra.mxu0 0.0
    %120 = vmatprep.subr.mxu0 0.0
    %121 = vmatpush1.msra.mxu0 0.0
    %122 = vmatprep.subr.mxu0 0.0
    %123 = vmatpush1.msra.mxu0 0.0
    %124 = vmatprep.subr.mxu0 0.0
    %125 = vmatpush1.msra.mxu0 0.0
    %126 = vmatprep.subr.mxu0 0.0
    %127 = vmatpush1.msra.mxu0 0.0
    %128 = vmatprep.subr.mxu0 0.0
    %129 = vmatpush1.msra.mxu0 0.0
    %130 = vmatprep.subr.mxu0 0.0
    %131 = vmatpush1.msra.mxu0 0.0
    %132 = vmatprep.subr.mxu0 0.0
    %133 = vmatpush1.msra.mxu0 0.0
    %134 = vmatprep.subr.mxu0 0.0
    %135 = vmatpush1.msra.mxu0 0.0
    %136 = vmatprep.subr.mxu0 0.0
    %137 = vmatpush1.msra.mxu0 0.0
    %138 = vmatprep.subr.mxu0 0.0
    %139 = vmatpush1.msra.mxu0 0.0
    %140 = vmatprep.subr.mxu0 0.0
    %141 = vmatpush1.msra.mxu0 0.0
    %142 = vmatprep.subr.mxu0 0.0
    %143 = vmatpush1.msra.mxu0 0.0
    %144 = vmatprep.subr.mxu0 0.0
    %145 = vmatpush1.msra.mxu0 0.0
    %146 = vmatprep.subr.mxu0 0.0
    %147 = vmatpush1.msra.mxu0 0.0
    %148 = vmatprep.subr.mxu0 0.0
    %149 = vmatpush1.msra.mxu0 0.0
    %150 = vmatprep.subr.mxu0 0.0
    %151 = vmatpush1.msra.mxu0 0.0
    %152 = vmatprep.subr.mxu0 0.0
    %153 = vmatpush1.msra.mxu0 0.0
    %154 = vmatprep.subr.mxu0 0.0
    %155 = vmatpush1.msra.mxu0 0.0
    %156 = vmatprep.subr.mxu0 0.0
    %157 = vmatpush1.msra.mxu0 0.0
    %158 = vmatprep.subr.mxu0 0.0
    %159 = vmatpush1.msra.mxu0 0.0
    %160 = vmatprep.subr.mxu0 0.0
    %161 = vmatpush1.msra.mxu0 0.0
    %162 = vmatprep.subr.mxu0 0.0
    %163 = vmatpush1.msra.mxu0 0.0
    %164 = vmatprep.subr.mxu0 0.0
    %165 = vmatpush1.msra.mxu0 0.0
    %166 = vmatprep.subr.mxu0 0.0
    %167 = vmatpush1.msra.mxu0 0.0
    %168 = vmatprep.subr.mxu0 0.0
    %169 = vmatpush1.msra.mxu0 0.0
    %170 = vmatprep.subr.mxu0 0.0
    %171 = vmatpush1.msra.mxu0 0.0
    %172 = vmatprep.subr.mxu0 0.0
    %173 = vmatpush1.msra.mxu0 0.0
    %174 = vmatprep.mubr.f32.mxu0 0.0
    %175 = vmatmul.mubr.f32.gmra.mrb[0].mxu0 %v99
    %v176 = vpop.f32.mrb[0].mxu0
    %v177 = vadd.f32 %v95, %v176
    %v178 = vpop.f32.mrb[0].mxu0
    %179 = vmatprep.mubr.f32.mxu0 0.0
    %180 = vmatmul.mubr.f32.gmra.mrb[0].mxu0 %v102
    %v181 = vpop.f32.mrb[0].mxu0
    %v182 = vadd.f32 %v95, %v181
    %v183 = vpop.f32.mrb[0].mxu0
    %184 = vmatprep.mubr.f32.mxu0 0.0
    %185 = vmatmul.mubr.f32.gmra.mrb[0].mxu0 %v105
    %v186 = vpop.f32.mrb[0].mxu0
    %v187 = vadd.f32 %v95, %v186
    %v188 = vpop.f32.mrb[0].mxu0
    %189 = vmatprep.mubr.f32.mxu0 0.0
    %190 = vmatmul.mubr.f32.gmra.mrb[0].mxu0 %v108
    %v191 = vpop.f32.mrb[0].mxu0
    %v192 = vadd.f32 %v95, %v191
    %v193 = vpop.f32.mrb[0].mxu0
    %194 = vdwg.mxu0
    %v195 = vmax.f32 %v177, 0.0
    %v196 = vmax.f32 %v182, 0.0
    %v197 = vmax.f32 %v187, 0.0
    %v198 = vmax.f32 %v192, 0.0
    %v199 = vld [vmem:[#allocation7] sm:$0xff]
    %v200 = vld [vmem:[#allocation7 + $0x8] sm:$0xff]
    %v201 = vld [vmem:[#allocation7 + $0x10] sm:$0xff]
    %v202 = vld [vmem:[#allocation7 + $0x18] sm:$0xff]
    %v203 = vld [vmem:[%s4] sm:$0x1]
    %v205 = vlaneseq
    %v206 = vshrl.u32 %v205, 7
    %v207 = vsub.s32 0, %v206
    %v208 = vrot.slane %v203, %v207
    %v211 = vsel %vm97, %v195, 0
    %v214 = vsel %vm97, %v196, 0
    %v217 = vsel %vm97, %v197, 0
    %v220 = vsel %vm97, %v198, 0
    %222 = vmatprep.subr.mxu0 0.0
    %223 = vmatpush1.msra.mxu0 %v199
    %224 = vmatprep.subr.mxu0 0.0
    %225 = vmatpush1.msra.mxu0 %v200
    %226 = vmatprep.subr.mxu0 0.0
    %227 = vmatpush1.msra.mxu0 %v201
    %228 = vmatprep.subr.mxu0 0.0
    %229 = vmatpush1.msra.mxu0 %v202
    %230 = vmatprep.subr.mxu0 0.0
    %231 = vmatpush1.msra.mxu0 0.0
    %232 = vmatprep.subr.mxu0 0.0
    %233 = vmatpush1.msra.mxu0 0.0
    %234 = vmatprep.subr.mxu0 0.0
    %235 = vmatpush1.msra.mxu0 0.0
    %236 = vmatprep.subr.mxu0 0.0
    %237 = vmatpush1.msra.mxu0 0.0
    %238 = vmatprep.subr.mxu0 0.0
    %239 = vmatpush1.msra.mxu0 0.0
    %240 = vmatprep.subr.mxu0 0.0
    %241 = vmatpush1.msra.mxu0 0.0
    %242 = vmatprep.subr.mxu0 0.0
    %243 = vmatpush1.msra.mxu0 0.0
    %244 = vmatprep.subr.mxu0 0.0
    %245 = vmatpush1.msra.mxu0 0.0
    %246 = vmatprep.subr.mxu0 0.0
    %247 = vmatpush1.msra.mxu0 0.0
    %248 = vmatprep.subr.mxu0 0.0
    %249 = vmatpush1.msra.mxu0 0.0
    %250 = vmatprep.subr.mxu0 0.0
    %251 = vmatpush1.msra.mxu0 0.0
    %252 = vmatprep.subr.mxu0 0.0
    %253 = vmatpush1.msra.mxu0 0.0
    %254 = vmatprep.subr.mxu0 0.0
    %255 = vmatpush1.msra.mxu0 0.0
    %256 = vmatprep.subr.mxu0 0.0
    %257 = vmatpush1.msra.mxu0 0.0
    %258 = vmatprep.subr.mxu0 0.0
    %259 = vmatpush1.msra.mxu0 0.0
    %260 = vmatprep.subr.mxu0 0.0
    %261 = vmatpush1.msra.mxu0 0.0
    %262 = vmatprep.subr.mxu0 0.0
    %263 = vmatpush1.msra.mxu0 0.0
    %264 = vmatprep.subr.mxu0 0.0
    %265 = vmatpush1.msra.mxu0 0.0
    %266 = vmatprep.subr.mxu0 0.0
    %267 = vmatpush1.msra.mxu0 0.0
    %268 = vmatprep.subr.mxu0 0.0
    %269 = vmatpush1.msra.mxu0 0.0
    %270 = vmatprep.subr.mxu0 0.0
    %271 = vmatpush1.msra.mxu0 0.0
    %272 = vmatprep.subr.mxu0 0.0
    %273 = vmatpush1.msra.mxu0 0.0
    %274 = vmatprep.subr.mxu0 0.0
    %275 = vmatpush1.msra.mxu0 0.0
    %276 = vmatprep.subr.mxu0 0.0
    %277 = vmatpush1.msra.mxu0 0.0
    %278 = vmatprep.subr.mxu0 0.0
    %279 = vmatpush1.msra.mxu0 0.0
    %280 = vmatprep.subr.mxu0 0.0
    %281 = vmatpush1.msra.mxu0 0.0
    %282 = vmatprep.subr.mxu0 0.0
    %283 = vmatpush1.msra.mxu0 0.0
    %284 = vmatprep.subr.mxu0 0.0
    %285 = vmatpush1.msra.mxu0 0.0
    %286 = vmatprep.mubr.f32.mxu0 0.0
    %287 = vmatmul.mubr.f32.gmra.mrb[0].mxu0 %v211
    %v288 = vpop.f32.mrb[0].mxu0
    %v289 = vadd.f32 %v208, %v288
    %v290 = vpop.f32.mrb[0].mxu0
    %291 = vmatprep.mubr.f32.mxu0 0.0
    %292 = vmatmul.mubr.f32.gmra.mrb[0].mxu0 %v214
    %v293 = vpop.f32.mrb[0].mxu0
    %v294 = vadd.f32 %v208, %v293
    %v295 = vpop.f32.mrb[0].mxu0
    %296 = vmatprep.mubr.f32.mxu0 0.0
    %297 = vmatmul.mubr.f32.gmra.mrb[0].mxu0 %v217
    %v298 = vpop.f32.mrb[0].mxu0
    %v299 = vadd.f32 %v208, %v298
    %v300 = vpop.f32.mrb[0].mxu0
    %301 = vmatprep.mubr.f32.mxu0 0.0
    %302 = vmatmul.mubr.f32.gmra.mrb[0].mxu0 %v220
    %v303 = vpop.f32.mrb[0].mxu0
    %v304 = vadd.f32 %v208, %v303
    %v305 = vpop.f32.mrb[0].mxu0
    %306 = vdwg.mxu0
    %v307 = vmax.f32 %v289, 0.0
    %v308 = vmax.f32 %v294, 0.0
    %v309 = vmax.f32 %v299, 0.0
    %v310 = vmax.f32 %v304, 0.0
    %v311 = vld [vmem:[#allocation8] sm:$0xff]
    %v312 = vld [vmem:[#allocation8 + $0x8] sm:$0xff]
    %v313 = vld [vmem:[#allocation8 + $0x10] sm:$0xff]
    %v314 = vld [vmem:[#allocation8 + $0x18] sm:$0xff]
    %v315 = vld [vmem:[%s6] sm:$0x1]
    %v317 = vlaneseq
    %v318 = vshrl.u32 %v317, 7
    %v319 = vsub.s32 0, %v318
    %v320 = vrot.slane %v315, %v319
    %v323 = vsel %vm97, %v307, 0
    %v326 = vsel %vm97, %v308, 0
    %v329 = vsel %vm97, %v309, 0
    %v332 = vsel %vm97, %v310, 0
    %334 = vmatprep.subr.mxu0 0.0
    %335 = vmatpush1.msra.mxu0 %v311
    %336 = vmatprep.subr.mxu0 0.0
    %337 = vmatpush1.msra.mxu0 %v312
    %338 = vmatprep.subr.mxu0 0.0
    %339 = vmatpush1.msra.mxu0 %v313
    %340 = vmatprep.subr.mxu0 0.0
    %341 = vmatpush1.msra.mxu0 %v314
    %342 = vmatprep.subr.mxu0 0.0
    %343 = vmatpush1.msra.mxu0 0.0
    %344 = vmatprep.subr.mxu0 0.0
    %345 = vmatpush1.msra.mxu0 0.0
    %346 = vmatprep.subr.mxu0 0.0
    %347 = vmatpush1.msra.mxu0 0.0
    %348 = vmatprep.subr.mxu0 0.0
    %349 = vmatpush1.msra.mxu0 0.0
    %350 = vmatprep.subr.mxu0 0.0
    %351 = vmatpush1.msra.mxu0 0.0
    %352 = vmatprep.subr.mxu0 0.0
    %353 = vmatpush1.msra.mxu0 0.0
    %354 = vmatprep.subr.mxu0 0.0
    %355 = vmatpush1.msra.mxu0 0.0
    %356 = vmatprep.subr.mxu0 0.0
    %357 = vmatpush1.msra.mxu0 0.0
    %358 = vmatprep.subr.mxu0 0.0
    %359 = vmatpush1.msra.mxu0 0.0
    %360 = vmatprep.subr.mxu0 0.0
    %361 = vmatpush1.msra.mxu0 0.0
    %362 = vmatprep.subr.mxu0 0.0
    %363 = vmatpush1.msra.mxu0 0.0
    %364 = vmatprep.subr.mxu0 0.0
    %365 = vmatpush1.msra.mxu0 0.0
    %366 = vmatprep.subr.mxu0 0.0
    %367 = vmatpush1.msra.mxu0 0.0
    %368 = vmatprep.subr.mxu0 0.0
    %369 = vmatpush1.msra.mxu0 0.0
    %370 = vmatprep.subr.mxu0 0.0
    %371 = vmatpush1.msra.mxu0 0.0
    %372 = vmatprep.subr.mxu0 0.0
    %373 = vmatpush1.msra.mxu0 0.0
    %374 = vmatprep.subr.mxu0 0.0
    %375 = vmatpush1.msra.mxu0 0.0
    %376 = vmatprep.subr.mxu0 0.0
    %377 = vmatpush1.msra.mxu0 0.0
    %378 = vmatprep.subr.mxu0 0.0
    %379 = vmatpush1.msra.mxu0 0.0
    %380 = vmatprep.subr.mxu0 0.0
    %381 = vmatpush1.msra.mxu0 0.0
    %382 = vmatprep.subr.mxu0 0.0
    %383 = vmatpush1.msra.mxu0 0.0
    %384 = vmatprep.subr.mxu0 0.0
    %385 = vmatpush1.msra.mxu0 0.0
    %386 = vmatprep.subr.mxu0 0.0
    %387 = vmatpush1.msra.mxu0 0.0
    %388 = vmatprep.subr.mxu0 0.0
    %389 = vmatpush1.msra.mxu0 0.0
    %390 = vmatprep.subr.mxu0 0.0
    %391 = vmatpush1.msra.mxu0 0.0
    %392 = vmatprep.subr.mxu0 0.0
    %393 = vmatpush1.msra.mxu0 0.0
    %394 = vmatprep.subr.mxu0 0.0
    %395 = vmatpush1.msra.mxu0 0.0
    %396 = vmatprep.subr.mxu0 0.0
    %397 = vmatpush1.msra.mxu0 0.0
    %398 = vmatprep.mubr.f32.mxu0 0.0
    %399 = vmatmul.mubr.f32.gmra.mrb[0].mxu0 %v323
    %v400 = vpop.f32.mrb[0].mxu0
    %v401 = vadd.f32 %v320, %v400
    %v402 = vpop.f32.mrb[0].mxu0
    %403 = vmatprep.mubr.f32.mxu0 0.0
    %404 = vmatmul.mubr.f32.gmra.mrb[0].mxu0 %v326
    %v405 = vpop.f32.mrb[0].mxu0
    %v406 = vadd.f32 %v320, %v405
    %v407 = vpop.f32.mrb[0].mxu0
    %408 = vmatprep.mubr.f32.mxu0 0.0
    %409 = vmatmul.mubr.f32.gmra.mrb[0].mxu0 %v329
    %v410 = vpop.f32.mrb[0].mxu0
    %v411 = vadd.f32 %v320, %v410
    %v412 = vpop.f32.mrb[0].mxu0
    %413 = vmatprep.mubr.f32.mxu0 0.0
    %414 = vmatmul.mubr.f32.gmra.mrb[0].mxu0 %v332
    %v415 = vpop.f32.mrb[0].mxu0
    %v416 = vadd.f32 %v320, %v415
    %v417 = vpop.f32.mrb[0].mxu0
    %418 = vdwg.mxu0
    %v419 = vlaneseq
    %v420 = vand.u32 %v419, 127
    %v421 = vtanh.pop %v401
    %v422 = vtanh.pop %v406
    %v423 = vtanh.pop %v411
    %v424 = vtanh.pop %v416
    %v425 = vadd.f32 %v421, 1.0
    %v426 = vadd.f32 %v422, 1.0
    %v427 = vadd.f32 %v423, 1.0
    %v428 = vadd.f32 %v424, 1.0
    %v429 = vmul.f32 %v425, 3.5
    %v430 = vmul.f32 %v426, 3.5
    %v431 = vmul.f32 %v427, 3.5
    %v432 = vmul.f32 %v428, 3.5
    %v433 = vadd.f32 %v429, -5.0
    %v434 = vadd.f32 %v430, -5.0
    %v435 = vadd.f32 %v431, -5.0
    %v436 = vadd.f32 %v432, -5.0
    %v437 = vmul.f32 %v433, 1.442695
    %v438 = vpow.pop %v437
    %v439 = vmul.f32 %v434, 1.442695
    %v440 = vpow.pop %v439
    %v441 = vmul.f32 %v435, 1.442695
    %v442 = vpow.pop %v441
    %v443 = vmul.f32 %v436, 1.442695
    %v444 = vpow.pop %v443
    %vm445 = vcmp.ge.s32.totalorder %v420, 64
    %v446 = vsel %vm445, %v438, %v401
    %v447 = vsel %vm445, %v440, %v406
    %v448 = vsel %vm445, %v442, %v411
    %v449 = vsel %vm445, %v444, %v416
    %450 = vst [vmem:[#allocation10] sm:$0xff] %v446
    %451 = vst [vmem:[#allocation10 + $0x8] sm:$0xff] %v447
    %452 = vst [vmem:[#allocation10 + $0x10] sm:$0xff] %v448
    %453 = vst [vmem:[#allocation10 + $0x18] sm:$0xff] %v449
    // Predicated region
    $region46: #{tpu_custom_call.1} parent=1 // pred_check
      _
    $region47: #{tpu_custom_call.1} parent=1 // pred_check_branch
      %455 = sbr.rel (0) target = $region49
    $region48: #{tpu_custom_call.1} parent=1 // pred_region
      %s457 = ssub.s32 512, 512
      %458 = vsyncadd [#allocation4], %s457
      %s459 = sshll.u32 [#allocation10], 4
      %s460 = int_to_ptr.vmem [resolvable:$true] %s459
      %465 = dma.vmem_to_hbm [thread:$0]  %s460, 512, %s7, [#allocation4], 128, 128, 8
    $region49: #{tpu_custom_call.1} parent=1 // pred_fallthru
      _
    // Predicated region
    $region50: #{tpu_custom_call.1} parent=1 // pred_check
      _
    $region51: #{tpu_custom_call.1} parent=1 // pred_check_branch
      %467 = sbr.rel (0) target = $region53
    $region52: #{tpu_custom_call.1} parent=1 // pred_region
      %468 = dma.done [#allocation4], 512
    $region53: #{tpu_custom_call.1} parent=1 // pred_fallthru
      _
    %469 = vsyncpa [#allocation3], 1
    %470 = vsyncpa [#allocation6], 1
    %471 = vsyncpa [#allocation9], 1
    %472 = vsyncpa [#allocation4], 1

</llo_original>
